<compile_context>
chip_gen: v6e
topology: v6e:2x2x1
jax: 0.10.0
libtpu: 0.0.40
codegen_flags: <defaults>
</compile_context>

<pallas_src>
import jax
import jax.numpy as jnp
from jax.experimental import pallas as pl
from jax.experimental.pallas import tpu as pltpu


def tn_kernel(m_ref, data_ref, wih_w_ref, wih_b_ref, whh_w_ref, whh_b_ref,
              s_ref, h2o_w_ref, h2o_b_ref, hidden_ref, out_ref):
    # m:      (TB, R)            batch tile of m.squeeze(1)
    # data:   (TB, R*R)          batch tile of data
    # wih_w:  (R, R*R)           wih_w @ E  (w1 pre-replicated along lanes)
    # wih_b:  (1, R*R)           wih_b @ E
    # whh_w:  (R*R, R*R)
    # whh_b:  (1, R*R)
    # s:      (R*R, R)           0/1 segment-sum matrix
    # h2o_w:  (R, O), h2o_b: (1, O)
    f32 = jnp.float32

    # w1 replicated per k so it lines up lane-for-lane with row-major w2.
    w1_rep = jnp.dot(m_ref[...], wih_w_ref[...],
                     preferred_element_type=f32) + wih_b_ref[...]   # (TB, R*R)
    w2 = jnp.dot(data_ref[...], whh_w_ref[...],
                 preferred_element_type=f32) + whh_b_ref[...]       # (TB, R*R)

    # hidden[b,k] = tanh( sum_j w1[b,j] * w2[b,j,k] )  via VPU mul + segment-sum
    hidden = jnp.tanh(jnp.dot(w1_rep * w2, s_ref[...],
                              preferred_element_type=f32))          # (TB, R)
    hidden_ref[...] = hidden
    out_ref[...] = jnp.dot(hidden, h2o_w_ref[...],
                           preferred_element_type=f32) + h2o_b_ref[...]


def prepare_tn_weights(params):
    """Fold the constant 0/1 expansion matrices into the weights ONCE."""
    f32 = jnp.float32
    R = params["wih_w"].shape[0]
    eye_r = jnp.eye(R, dtype=f32)
    E = jnp.repeat(eye_r, R, axis=1)            # (R, R*R):  E[j, j*R+k] = 1
    S = jnp.tile(eye_r, (R, 1))                 # (R*R, R):  S[j*R+k, k] = 1
    return {
        "wih_w_exp": params["wih_w"] @ E,       # (R, R*R)
        "wih_b_exp": params["wih_b"] @ E,       # (1, R*R)
        "whh_w": params["whh_w"],               # (R*R, R*R)
        "whh_b": params["whh_b"],               # (1, R*R)
        "S": S,                                 # (R*R, R)
        "h2o_w": params["h2o_w"],               # (R, O)
        "h2o_b": params["h2o_b"],               # (1, O)
    }


def tn_forward(data, m, prepared, *, tile_b=4096):
    """data: (B, rank*rank) f32, m: (B, 1, rank) f32, prepared: prepare_tn_weights()."""
    B = data.shape[0]
    R = m.shape[-1]
    RR = R * R
    O = prepared["h2o_w"].shape[1]
    assert data.shape[1] == RR

    m2d = m.reshape(B, R)

    # ---- batch tiling: pad only to 8-row granularity, keep >= 2 grid steps ---
    b8 = B + ((-B) % 8)
    min_steps = 2 if b8 >= 16 else 1              # v7x: use both TensorCores
    n_steps = max(pl.cdiv(b8, tile_b), min_steps)
    tb = ((pl.cdiv(b8, n_steps) + 7) // 8) * 8
    padded_b = n_steps * tb                       # waste < 8 * n_steps rows
    if padded_b != B:
        m2d = jnp.pad(m2d, ((0, padded_b - B), (0, 0)))
        data = jnp.pad(data, ((0, padded_b - B), (0, 0)))

    # ---- VMEM budget (double-buffered tiles + in-kernel intermediates) ------
    io_bytes = 2 * tb * (R + RR + R + O) * 4
    inter_bytes = 3 * tb * RR * 4
    weight_bytes = 4 * (R * RR + RR + RR * RR + RR + RR * R + R * O + O)
    vmem_limit = int(min(max(2 * (io_bytes + inter_bytes + weight_bytes)
                             + (2 << 20), 32 << 20), 48 << 20))

    hidden_p, out_p = pl.pallas_call(
        tn_kernel,
        out_shape=(jax.ShapeDtypeStruct((padded_b, R), jnp.float32),
                   jax.ShapeDtypeStruct((padded_b, O), jnp.float32)),
        grid=(n_steps,),
        in_specs=[
            pl.BlockSpec((tb, R), lambda i: (i, 0)),       # m   (batch-tiled)
            pl.BlockSpec((tb, RR), lambda i: (i, 0)),      # data(batch-tiled)
            pl.BlockSpec((R, RR), lambda i: (0, 0)),       # wih_w_exp (resident)
            pl.BlockSpec((1, RR), lambda i: (0, 0)),       # wih_b_exp
            pl.BlockSpec((RR, RR), lambda i: (0, 0)),      # whh_w
            pl.BlockSpec((1, RR), lambda i: (0, 0)),       # whh_b
            pl.BlockSpec((RR, R), lambda i: (0, 0)),       # S
            pl.BlockSpec((R, O), lambda i: (0, 0)),        # h2o_w
            pl.BlockSpec((1, O), lambda i: (0, 0)),        # h2o_b
        ],
        out_specs=(pl.BlockSpec((tb, R), lambda i: (i, 0)),
                   pl.BlockSpec((tb, O), lambda i: (i, 0))),
        compiler_params=pltpu.CompilerParams(
            dimension_semantics=("parallel",),
            vmem_limit_bytes=vmem_limit),
    )(m2d, data, prepared["wih_w_exp"], prepared["wih_b_exp"],
      prepared["whh_w"], prepared["whh_b"], prepared["S"],
      prepared["h2o_w"], prepared["h2o_b"])

    hidden = hidden_p[:B].reshape(B, 1, R)
    output = out_p[:B].reshape(B, 1, O)
    return hidden, output


def init_params(key, rank, output_size):
    """Deterministic Linear-style init. Weights stored (in, out), biases (1, out)."""
    ks = jax.random.split(key, 6)

    def linear(kw, kb, fan_in, fan_out):
        bound = 1.0 / jnp.sqrt(fan_in)
        w = jax.random.uniform(kw, (fan_in, fan_out), jnp.float32, -bound, bound)
        b = jax.random.uniform(kb, (1, fan_out), jnp.float32, -bound, bound)
        return w, b

    wih_w, wih_b = linear(ks[0], ks[1], rank, rank)
    whh_w, whh_b = linear(ks[2], ks[3], rank * rank, rank * rank)
    h2o_w, h2o_b = linear(ks[4], ks[5], rank, output_size)
    return {"wih_w": wih_w, "wih_b": wih_b,
            "whh_w": whh_w, "whh_b": whh_b,
            "h2o_w": h2o_w, "h2o_b": h2o_b}


def tn_forward_ref(data, m, params):
    """Pure-JAX reference mirroring the PyTorch forward."""
    B = data.shape[0]
    rank = m.shape[-1]
    w1 = m.reshape(B, rank) @ params["wih_w"] + params["wih_b"]          # (B, R)
    w2 = (data @ params["whh_w"] + params["whh_b"]).reshape(B, rank, rank)
    hidden = jnp.tanh(jnp.einsum('bij,bjk->bik', w1[:, None, :], w2))    # (B,1,R)
    output = hidden @ params["h2o_w"] + params["h2o_b"]                  # (B,1,O)
    return hidden, output


if __name__ == "__main__":
    rank = 8
    output_size = 16
    batch = 4

    key = jax.random.PRNGKey(0)
    k_data, k_m, k_params = jax.random.split(key, 3)

    data = jax.random.normal(k_data, (batch, rank * rank), jnp.float32)
    m = jax.random.normal(k_m, (batch, 1, rank), jnp.float32)
    params = init_params(k_params, rank, output_size)
    prepared = prepare_tn_weights(params)

    hidden, output = tn_forward(data, m, prepared)
    jax.block_until_ready((hidden, output))

    hidden_ref, output_ref = tn_forward_ref(data, m, params)
    assert hidden.shape == (batch, 1, rank)
    assert output.shape == (batch, 1, output_size)
    assert jnp.allclose(hidden, hidden_ref, atol=1e-5, rtol=1e-5)
    assert jnp.allclose(output, output_ref, atol=1e-5, rtol=1e-5)

    print("KERNEL_OK")
</pallas_src>

<mosaic_0001>
module attributes {stable_mosaic.version = 11 : i64} {
  func.func @tn_kernel(%arg0: i32, %arg1: memref<8x8xf32, #tpu.memory_space<vmem>>, %arg2: memref<8x64xf32, #tpu.memory_space<vmem>>, %arg3: memref<8x64xf32, #tpu.memory_space<vmem>>, %arg4: memref<1x64xf32, #tpu.memory_space<vmem>>, %arg5: memref<64x64xf32, #tpu.memory_space<vmem>>, %arg6: memref<1x64xf32, #tpu.memory_space<vmem>>, %arg7: memref<64x8xf32, #tpu.memory_space<vmem>>, %arg8: memref<8x16xf32, #tpu.memory_space<vmem>>, %arg9: memref<1x16xf32, #tpu.memory_space<vmem>>, %arg10: memref<8x8xf32, #tpu.memory_space<vmem>>, %arg11: memref<8x16xf32, #tpu.memory_space<vmem>>) attributes {dimension_semantics = [#tpu.dimension_semantics<parallel>], iteration_bounds = array<i64: 1>, scalar_prefetch = 0 : i64, scratch_operands = 0 : i64, tpu.core_type = #tpu.core_type<tc>, window_params = [{transform_indices = @transform_0, window_bounds = array<i64: 8, 8>}, {transform_indices = @transform_1, window_bounds = array<i64: 8, 64>}, {pipeline_mode = #tpu.pipeline_mode<synchronous>, transform_indices = @transform_2, window_bounds = array<i64: 8, 64>}, {pipeline_mode = #tpu.pipeline_mode<synchronous>, transform_indices = @transform_3, window_bounds = array<i64: 1, 64>}, {pipeline_mode = #tpu.pipeline_mode<synchronous>, transform_indices = @transform_4, window_bounds = array<i64: 64, 64>}, {pipeline_mode = #tpu.pipeline_mode<synchronous>, transform_indices = @transform_5, window_bounds = array<i64: 1, 64>}, {pipeline_mode = #tpu.pipeline_mode<synchronous>, transform_indices = @transform_6, window_bounds = array<i64: 64, 8>}, {pipeline_mode = #tpu.pipeline_mode<synchronous>, transform_indices = @transform_7, window_bounds = array<i64: 8, 16>}, {pipeline_mode = #tpu.pipeline_mode<synchronous>, transform_indices = @transform_8, window_bounds = array<i64: 1, 16>}, {transform_indices = @transform_9, window_bounds = array<i64: 8, 8>}, {transform_indices = @transform_10, window_bounds = array<i64: 8, 16>}]} {
    %c0 = arith.constant 0 : index
    %c0_0 = arith.constant 0 : index
    %0 = vector.load %arg1[%c0, %c0_0] : memref<8x8xf32, #tpu.memory_space<vmem>>, vector<8x8xf32>
    %c0_1 = arith.constant 0 : index
    %c0_2 = arith.constant 0 : index
    %1 = vector.load %arg3[%c0_1, %c0_2] : memref<8x64xf32, #tpu.memory_space<vmem>>, vector<8x64xf32>
    %cst = arith.constant dense<0.000000e+00> : vector<8x64xf32>
    %2 = tpu.matmul %0, %1, %cst {dimension_numbers = #tpu.dot_dimension_numbers<[1], [0], [0], [1], [0, 0, 1, 1], [], []>} : vector<8x8xf32>, vector<8x64xf32>, vector<8x64xf32> -> vector<8x64xf32>
    %c0_3 = arith.constant 0 : index
    %c0_4 = arith.constant 0 : index
    %3 = vector.load %arg4[%c0_3, %c0_4] : memref<1x64xf32, #tpu.memory_space<vmem>>, vector<1x64xf32>
    %4 = vector.broadcast %3 : vector<1x64xf32> to vector<8x64xf32>
    %5 = arith.addf %2, %4 : vector<8x64xf32>
    %c0_5 = arith.constant 0 : index
    %c0_6 = arith.constant 0 : index
    %6 = vector.load %arg2[%c0_5, %c0_6] : memref<8x64xf32, #tpu.memory_space<vmem>>, vector<8x64xf32>
    %c0_7 = arith.constant 0 : index
    %c0_8 = arith.constant 0 : index
    %7 = vector.load %arg5[%c0_7, %c0_8] : memref<64x64xf32, #tpu.memory_space<vmem>>, vector<64x64xf32>
    %cst_9 = arith.constant dense<0.000000e+00> : vector<8x64xf32>
    %8 = tpu.matmul %6, %7, %cst_9 {dimension_numbers = #tpu.dot_dimension_numbers<[1], [0], [0], [1], [0, 0, 1, 1], [], []>} : vector<8x64xf32>, vector<64x64xf32>, vector<8x64xf32> -> vector<8x64xf32>
    %c0_10 = arith.constant 0 : index
    %c0_11 = arith.constant 0 : index
    %9 = vector.load %arg6[%c0_10, %c0_11] : memref<1x64xf32, #tpu.memory_space<vmem>>, vector<1x64xf32>
    %10 = vector.broadcast %9 : vector<1x64xf32> to vector<8x64xf32>
    %11 = arith.addf %8, %10 : vector<8x64xf32>
    %12 = arith.mulf %5, %11 : vector<8x64xf32>
    %c0_12 = arith.constant 0 : index
    %c0_13 = arith.constant 0 : index
    %13 = vector.load %arg7[%c0_12, %c0_13] : memref<64x8xf32, #tpu.memory_space<vmem>>, vector<64x8xf32>
    %cst_14 = arith.constant dense<0.000000e+00> : vector<8x8xf32>
    %14 = tpu.matmul %12, %13, %cst_14 {dimension_numbers = #tpu.dot_dimension_numbers<[1], [0], [0], [1], [0, 0, 1, 1], [], []>} : vector<8x64xf32>, vector<64x8xf32>, vector<8x8xf32> -> vector<8x8xf32>
    %15 = math.tanh %14 : vector<8x8xf32>
    %c0_15 = arith.constant 0 : index
    %c0_16 = arith.constant 0 : index
    %16 = vector.load %arg10[%c0_15, %c0_16] : memref<8x8xf32, #tpu.memory_space<vmem>>, vector<8x8xf32>
    tpu.vector_store %arg10[%c0_15, %c0_16], %15 {strides = array<i32>} : memref<8x8xf32, #tpu.memory_space<vmem>>, vector<8x8xf32>,
    %c0_17 = arith.constant 0 : index
    %c0_18 = arith.constant 0 : index
    %17 = vector.load %arg8[%c0_17, %c0_18] : memref<8x16xf32, #tpu.memory_space<vmem>>, vector<8x16xf32>
    %cst_19 = arith.constant dense<0.000000e+00> : vector<8x16xf32>
    %18 = tpu.matmul %15, %17, %cst_19 {dimension_numbers = #tpu.dot_dimension_numbers<[1], [0], [0], [1], [0, 0, 1, 1], [], []>} : vector<8x8xf32>, vector<8x16xf32>, vector<8x16xf32> -> vector<8x16xf32>
    %c0_20 = arith.constant 0 : index
    %c0_21 = arith.constant 0 : index
    %19 = vector.load %arg9[%c0_20, %c0_21] : memref<1x16xf32, #tpu.memory_space<vmem>>, vector<1x16xf32>
    %20 = vector.broadcast %19 : vector<1x16xf32> to vector<8x16xf32>
    %21 = arith.addf %18, %20 : vector<8x16xf32>
    %c0_22 = arith.constant 0 : index
    %c0_23 = arith.constant 0 : index
    %22 = vector.load %arg11[%c0_22, %c0_23] : memref<8x16xf32, #tpu.memory_space<vmem>>, vector<8x16xf32>
    tpu.vector_store %arg11[%c0_22, %c0_23], %21 {strides = array<i32>} : memref<8x16xf32, #tpu.memory_space<vmem>>, vector<8x16xf32>,
    return
  }
  func.func @transform_0(%arg0: i32) -> (i32, i32) {
    %c0_i32 = arith.constant 0 : i32
    %c0_i32_0 = arith.constant 0 : i32
    return %arg0, %c0_i32 : i32, i32
  }
  func.func @transform_1(%arg0: i32) -> (i32, i32) {
    %c0_i32 = arith.constant 0 : i32
    %c0_i32_0 = arith.constant 0 : i32
    return %arg0, %c0_i32 : i32, i32
  }
  func.func @transform_2(%arg0: i32) -> (i32, i32) {
    %c0_i32 = arith.constant 0 : i32
    %c0_i32_0 = arith.constant 0 : i32
    %c0_i32_1 = arith.constant 0 : i32
    return %c0_i32, %c0_i32_0 : i32, i32
  }
  func.func @transform_3(%arg0: i32) -> (i32, i32) {
    %c0_i32 = arith.constant 0 : i32
    %c0_i32_0 = arith.constant 0 : i32
    %c0_i32_1 = arith.constant 0 : i32
    return %c0_i32, %c0_i32_0 : i32, i32
  }
  func.func @transform_4(%arg0: i32) -> (i32, i32) {
    %c0_i32 = arith.constant 0 : i32
    %c0_i32_0 = arith.constant 0 : i32
    %c0_i32_1 = arith.constant 0 : i32
    return %c0_i32, %c0_i32_0 : i32, i32
  }
  func.func @transform_5(%arg0: i32) -> (i32, i32) {
    %c0_i32 = arith.constant 0 : i32
    %c0_i32_0 = arith.constant 0 : i32
    %c0_i32_1 = arith.constant 0 : i32
    return %c0_i32, %c0_i32_0 : i32, i32
  }
  func.func @transform_6(%arg0: i32) -> (i32, i32) {
    %c0_i32 = arith.constant 0 : i32
    %c0_i32_0 = arith.constant 0 : i32
    %c0_i32_1 = arith.constant 0 : i32
    return %c0_i32, %c0_i32_0 : i32, i32
  }
  func.func @transform_7(%arg0: i32) -> (i32, i32) {
    %c0_i32 = arith.constant 0 : i32
    %c0_i32_0 = arith.constant 0 : i32
    %c0_i32_1 = arith.constant 0 : i32
    return %c0_i32, %c0_i32_0 : i32, i32
  }
  func.func @transform_8(%arg0: i32) -> (i32, i32) {
    %c0_i32 = arith.constant 0 : i32
    %c0_i32_0 = arith.constant 0 : i32
    %c0_i32_1 = arith.constant 0 : i32
    return %c0_i32, %c0_i32_0 : i32, i32
  }
  func.func @transform_9(%arg0: i32) -> (i32, i32) {
    %c0_i32 = arith.constant 0 : i32
    %c0_i32_0 = arith.constant 0 : i32
    return %arg0, %c0_i32 : i32, i32
  }
  func.func @transform_10(%arg0: i32) -> (i32, i32) {
    %c0_i32 = arith.constant 0 : i32
    %c0_i32_0 = arith.constant 0 : i32
    return %arg0, %c0_i32 : i32, i32
  }
}

</mosaic_0001>

<llo_original>
// kernel: tpu_custom_call.1
$region0: #{tpu_custom_call.1}
  #allocation0 [shape = 'u32[]', space=smem, size = 0x4, offset = 0x4, fixed_abs, tag = 'smem constant byte address 0x4 - core index']
  #allocation1 [shape = 'u32[144,128]{1,0:T(1,128)}', space=vmem, size = 0x12000, scoped, tag = 'internal scratch']
  %s0 = inlined_call_operand.vmem [shape: f32[8,8], index: 0, kind: input, shape index: {}]
  %s1 = inlined_call_operand.hbm [shape: f32[8,64], index: 1, kind: input, shape index: {}]
  %s2 = inlined_call_operand.hbm [shape: f32[8,64], index: 2, kind: input, shape index: {}]
  %s3 = inlined_call_operand.vmem [shape: f32[1,64], index: 3, kind: input, shape index: {}]
  %s4 = inlined_call_operand.vmem [shape: f32[64,64], index: 4, kind: input, shape index: {}]
  %s5 = inlined_call_operand.vmem [shape: f32[1,64], index: 5, kind: input, shape index: {}]
  %s6 = inlined_call_operand.vmem [shape: f32[64,8], index: 6, kind: input, shape index: {}]
  %s7 = inlined_call_operand.hbm [shape: f32[8,16], index: 7, kind: input, shape index: {}]
  %s8 = inlined_call_operand.vmem [shape: f32[1,16], index: 8, kind: input, shape index: {}]
  %s9 = inlined_call_operand.hbm [shape: f32[8,8], index: 9, kind: output, shape index: {0}]
  %s10 = inlined_call_operand.hbm [shape: f32[8,16], index: 10, kind: output, shape index: {1}]
  %11 = xla_tuple %s9, %s10
  %s12 = sld [smem:[#allocation0]]
  $region66: #{tpu_custom_call.1} parent=0
    _
  %s14 = ssub.s32 1, %s12
  %s15 = scalar_select 0, %s14, %s12
  $region1: #{tpu_custom_call.1} parent=0
    #allocation2 [shape = 'u8[4096]{0}', space=vmem, size = 0x1000, scoped, tag = 'input window, operand 1, single buffered']
    #allocation3 [shape = 's32[1]{0}', space=sflag, size = 0x4, scoped, tag = 'scoped memory for tpu_custom_call.1']
    #allocation4 [shape = 's32[1]{0}', space=sflag, size = 0x4, scoped, tag = 'scoped memory for tpu_custom_call.1']
    #allocation5 [shape = 'u8[4096]{0}', space=vmem, size = 0x1000, scoped, tag = 'input window, operand 2, single buffered']
    #allocation6 [shape = 's32[1]{0}', space=sflag, size = 0x4, scoped, tag = 'scoped memory for tpu_custom_call.1']
    #allocation7 [shape = 'u8[4096]{0}', space=vmem, size = 0x1000, scoped, tag = 'input window, operand 7, single buffered']
    #allocation8 [shape = 'u8[4096]{0}', space=vmem, size = 0x1000, scoped, tag = 'output window, operand 0, single buffered']
    #allocation9 [shape = 'u8[4096]{0}', space=vmem, size = 0x1000, scoped, tag = 'output window, operand 1, single buffered']
    #allocation10 [shape = 's32[1]{0}', space=sflag, size = 0x4, scoped, tag = 'scoped memory for tpu_custom_call.1']
    %16 = vsyncpa [#allocation3], 0
    %17 = vsyncpa [#allocation6], 0
    %18 = vsyncpa [#allocation4], 0
    %19 = vsyncpa [#allocation10], 0
    // Predicated region
    $region2: #{tpu_custom_call.1} parent=1 // pred_check
      _
    $region3: #{tpu_custom_call.1} parent=1 // pred_check_branch
      %21 = sbr.rel (0) target = $region5
    $region4: #{tpu_custom_call.1} parent=1 // pred_region
      _
    $region5: #{tpu_custom_call.1} parent=1 // pred_fallthru
      _
    // Predicated region
    $region6: #{tpu_custom_call.1} parent=1 // pred_check
      _
    $region7: #{tpu_custom_call.1} parent=1 // pred_check_branch
      %23 = sbr.rel (0) target = $region9
    $region8: #{tpu_custom_call.1} parent=1 // pred_region
      %s25 = ssub.s32 128, 128
      %26 = vsyncadd [#allocation3], %s25
      %s28 = sshll.u32 [#allocation2], 4
      %s29 = int_to_ptr.vmem [resolvable:$true] %s28
      %31 = dma.hbm_to_vmem [thread:$0]  %s1, 128, %s29, [#allocation3]
    $region9: #{tpu_custom_call.1} parent=1 // pred_fallthru
      _
    // Predicated region
    $region10: #{tpu_custom_call.1} parent=1 // pred_check
      _
    $region11: #{tpu_custom_call.1} parent=1 // pred_check_branch
      %33 = sbr.rel (0) target = $region13
    $region12: #{tpu_custom_call.1} parent=1 // pred_region
      %s35 = ssub.s32 128, 128
      %36 = vsyncadd [#allocation6], %s35
      %s38 = sshll.u32 [#allocation5], 4
      %s39 = int_to_ptr.vmem [resolvable:$true] %s38
      %41 = dma.hbm_to_vmem [thread:$0]  %s2, 128, %s39, [#allocation6]
    $region13: #{tpu_custom_call.1} parent=1 // pred_fallthru
      _
    // Predicated region
    $region14: #{tpu_custom_call.1} parent=1 // pred_check
      _
    $region15: #{tpu_custom_call.1} parent=1 // pred_check_branch
      %43 = sbr.rel (0) target = $region17
    $region16: #{tpu_custom_call.1} parent=1 // pred_region
      _
    $region17: #{tpu_custom_call.1} parent=1 // pred_fallthru
      _
    // Predicated region
    $region18: #{tpu_custom_call.1} parent=1 // pred_check
      _
    $region19: #{tpu_custom_call.1} parent=1 // pred_check_branch
      %45 = sbr.rel (0) target = $region21
    $region20: #{tpu_custom_call.1} parent=1 // pred_region
      _
    $region21: #{tpu_custom_call.1} parent=1 // pred_fallthru
      _
    // Predicated region
    $region22: #{tpu_custom_call.1} parent=1 // pred_check
      _
    $region23: #{tpu_custom_call.1} parent=1 // pred_check_branch
      %47 = sbr.rel (0) target = $region25
    $region24: #{tpu_custom_call.1} parent=1 // pred_region
      _
    $region25: #{tpu_custom_call.1} parent=1 // pred_fallthru
      _
    // Predicated region
    $region26: #{tpu_custom_call.1} parent=1 // pred_check
      _
    $region27: #{tpu_custom_call.1} parent=1 // pred_check_branch
      %49 = sbr.rel (0) target = $region29
    $region28: #{tpu_custom_call.1} parent=1 // pred_region
      _
    $region29: #{tpu_custom_call.1} parent=1 // pred_fallthru
      _
    // Predicated region
    $region30: #{tpu_custom_call.1} parent=1 // pred_check
      _
    $region31: #{tpu_custom_call.1} parent=1 // pred_check_branch
      %51 = sbr.rel (0) target = $region33
    $region32: #{tpu_custom_call.1} parent=1 // pred_region
      %s53 = ssub.s32 128, 128
      %54 = vsyncadd [#allocation6], %s53
      %s56 = sshll.u32 [#allocation7], 4
      %s57 = int_to_ptr.vmem [resolvable:$true] %s56
      %59 = dma.hbm_to_vmem [thread:$0]  %s7, 128, %s57, [#allocation6]
    $region33: #{tpu_custom_call.1} parent=1 // pred_fallthru
      _
    // Predicated region
    $region34: #{tpu_custom_call.1} parent=1 // pred_check
      _
    $region35: #{tpu_custom_call.1} parent=1 // pred_check_branch
      %61 = sbr.rel (0) target = $region37
    $region36: #{tpu_custom_call.1} parent=1 // pred_region
      _
    $region37: #{tpu_custom_call.1} parent=1 // pred_fallthru
      _
    // Predicated region
    $region38: #{tpu_custom_call.1} parent=1 // pred_check
      _
    $region39: #{tpu_custom_call.1} parent=1 // pred_check_branch
      %63 = sbr.rel (0) target = $region41
    $region40: #{tpu_custom_call.1} parent=1 // pred_region
      %64 = dma.done [#allocation3], 128
    $region41: #{tpu_custom_call.1} parent=1 // pred_fallthru
      _
    // Predicated region
    $region42: #{tpu_custom_call.1} parent=1 // pred_check
      _
    $region43: #{tpu_custom_call.1} parent=1 // pred_check_branch
      %66 = sbr.rel (0) target = $region45
    $region44: #{tpu_custom_call.1} parent=1 // pred_region
      %67 = dma.done [#allocation6], 128
    $region45: #{tpu_custom_call.1} parent=1 // pred_fallthru
      _
    // Predicated region
    $region46: #{tpu_custom_call.1} parent=1 // pred_check
      _
    $region47: #{tpu_custom_call.1} parent=1 // pred_check_branch
      %69 = sbr.rel (0) target = $region49
    $region48: #{tpu_custom_call.1} parent=1 // pred_region
      %70 = dma.done [#allocation6], 128
    $region49: #{tpu_custom_call.1} parent=1 // pred_fallthru
      _
    %v71 = vld [vmem:[%s0] sm:$0xff]
    %v72 = vld [vmem:[#allocation5] sm:$0xff]
    %v73 = vld [vmem:[%s3] sm:$0x1]
    %v75 = vlaneseq
    %v76 = vshrl.u32 %v75, 7
    %v77 = vsub.s32 0, %v76
    %v78 = vrot.slane %v73, %v77
    %vm80 = vcmask 64512
    %v82 = vsel %vm80, %v71, 0
    %84 = vmatprep.subr.mxu0 0.0
    %85 = vmatpush1.msra.mxu0 0.0
    %86 = vmatprep.subr.mxu0 0.0
    %87 = vmatpush1.msra.mxu0 0.0
    %88 = vmatprep.subr.mxu0 0.0
    %89 = vmatpush1.msra.mxu0 0.0
    %90 = vmatprep.subr.mxu0 0.0
    %91 = vmatpush1.msra.mxu0 0.0
    %92 = vmatprep.subr.mxu0 0.0
    %93 = vmatpush1.msra.mxu0 0.0
    %94 = vmatprep.subr.mxu0 0.0
    %95 = vmatpush1.msra.mxu0 0.0
    %96 = vmatprep.subr.mxu0 0.0
    %97 = vmatpush1.msra.mxu0 0.0
    %98 = vmatprep.subr.mxu0 0.0
    %99 = vmatpush1.msra.mxu0 0.0
    %100 = vmatprep.subr.mxu0 0.0
    %101 = vmatpush1.msra.mxu0 0.0
    %102 = vmatprep.subr.mxu0 0.0
    %103 = vmatpush1.msra.mxu0 0.0
    %104 = vmatprep.subr.mxu0 0.0
    %105 = vmatpush1.msra.mxu0 0.0
    %106 = vmatprep.subr.mxu0 0.0
    %107 = vmatpush1.msra.mxu0 0.0
    %108 = vmatprep.subr.mxu0 0.0
    %109 = vmatpush1.msra.mxu0 0.0
    %110 = vmatprep.subr.mxu0 0.0
    %111 = vmatpush1.msra.mxu0 0.0
    %112 = vmatprep.subr.mxu0 0.0
    %113 = vmatpush1.msra.mxu0 0.0
    %114 = vmatprep.subr.mxu0 0.0
    %115 = vmatpush1.msra.mxu0 %v72
    %116 = vmatprep.subr.mxu0 0.0
    %117 = vmatpush2.msra.mxu0 0.0
    %118 = vmatprep.subr.mxu0 0.0
    %119 = vmatpush2.msra.mxu0 0.0
    %120 = vmatprep.subr.mxu0 0.0
    %121 = vmatpush2.msra.mxu0 0.0
    %122 = vmatprep.subr.mxu0 0.0
    %123 = vmatpush2.msra.mxu0 0.0
    %124 = vmatprep.subr.mxu0 0.0
    %125 = vmatpush2.msra.mxu0 0.0
    %126 = vmatprep.subr.mxu0 0.0
    %127 = vmatpush2.msra.mxu0 0.0
    %128 = vmatprep.subr.mxu0 0.0
    %129 = vmatpush2.msra.mxu0 0.0
    %130 = vmatprep.subr.mxu0 0.0
    %131 = vmatpush2.msra.mxu0 0.0
    %132 = vmatprep.subr.mxu0 0.0
    %133 = vmatpush2.msra.mxu0 0.0
    %134 = vmatprep.subr.mxu0 0.0
    %135 = vmatpush2.msra.mxu0 0.0
    %136 = vmatprep.subr.mxu0 0.0
    %137 = vmatpush2.msra.mxu0 0.0
    %138 = vmatprep.subr.mxu0 0.0
    %139 = vmatpush2.msra.mxu0 0.0
    %140 = vmatprep.subr.mxu0 0.0
    %141 = vmatpush2.msra.mxu0 0.0
    %142 = vmatprep.subr.mxu0 0.0
    %143 = vmatpush2.msra.mxu0 0.0
    %144 = vmatprep.subr.mxu0 0.0
    %145 = vmatpush2.msra.mxu0 0.0
    %146 = vmatprep.subr.mxu0 0.0
    %147 = vmatpush2.msra.mxu0 0.0
    %148 = vmatprep.mubr.f32.mxu0 0.0
    %149 = vmatmul.mubr.f32.gmra.mxu0 %v82
    %v150 = vpop.f32.mrf.mxu0
    %v151 = vadd.f32 %v78, %v150
    %v152 = vpop.f32.mrf.mxu0
    %153 = vdwg.mxu0
    %v154 = vld [vmem:[#allocation2] sm:$0xff]
    %v155 = vld [vmem:[%s4] sm:$0xff]
    %v156 = vld [vmem:[%s4 + $0x8] sm:$0xff]
    %v157 = vld [vmem:[%s4 + $0x10] sm:$0xff]
    %v158 = vld [vmem:[%s4 + $0x18] sm:$0xff]
    %v159 = vld [vmem:[%s4 + $0x20] sm:$0xff]
    %v160 = vld [vmem:[%s4 + $0x28] sm:$0xff]
    %v161 = vld [vmem:[%s4 + $0x30] sm:$0xff]
    %v162 = vld [vmem:[%s4 + $0x38] sm:$0xff]
    %v163 = vld [vmem:[%s5] sm:$0x1]
    %v165 = vlaneseq
    %v166 = vshrl.u32 %v165, 7
    %v167 = vsub.s32 0, %v166
    %v168 = vrot.slane %v163, %v167
    %vm170 = vcmask 523264
    %v172 = vsel %vm170, %v154, 0
    %174 = vmatprep.subr.mxu0 0.0
    %175 = vmatpush1.msra.mxu0 0.0
    %176 = vmatprep.subr.mxu0 0.0
    %177 = vmatpush1.msra.mxu0 0.0
    %178 = vmatprep.subr.mxu0 0.0
    %179 = vmatpush1.msra.mxu0 0.0
    %180 = vmatprep.subr.mxu0 0.0
    %181 = vmatpush1.msra.mxu0 0.0
    %182 = vmatprep.subr.mxu0 0.0
    %183 = vmatpush1.msra.mxu0 0.0
    %184 = vmatprep.subr.mxu0 0.0
    %185 = vmatpush1.msra.mxu0 0.0
    %186 = vmatprep.subr.mxu0 0.0
    %187 = vmatpush1.msra.mxu0 0.0
    %188 = vmatprep.subr.mxu0 0.0
    %189 = vmatpush1.msra.mxu0 0.0
    %190 = vmatprep.subr.mxu0 0.0
    %191 = vmatpush1.msra.mxu0 %v162
    %192 = vmatprep.subr.mxu0 0.0
    %193 = vmatpush1.msra.mxu0 %v161
    %194 = vmatprep.subr.mxu0 0.0
    %195 = vmatpush1.msra.mxu0 %v160
    %196 = vmatprep.subr.mxu0 0.0
    %197 = vmatpush1.msra.mxu0 %v159
    %198 = vmatprep.subr.mxu0 0.0
    %199 = vmatpush1.msra.mxu0 %v158
    %200 = vmatprep.subr.mxu0 0.0
    %201 = vmatpush1.msra.mxu0 %v157
    %202 = vmatprep.subr.mxu0 0.0
    %203 = vmatpush1.msra.mxu0 %v156
    %204 = vmatprep.subr.mxu0 0.0
    %205 = vmatpush1.msra.mxu0 %v155
    %206 = vmatprep.subr.mxu0 0.0
    %207 = vmatpush2.msra.mxu0 0.0
    %208 = vmatprep.subr.mxu0 0.0
    %209 = vmatpush2.msra.mxu0 0.0
    %210 = vmatprep.subr.mxu0 0.0
    %211 = vmatpush2.msra.mxu0 0.0
    %212 = vmatprep.subr.mxu0 0.0
    %213 = vmatpush2.msra.mxu0 0.0
    %214 = vmatprep.subr.mxu0 0.0
    %215 = vmatpush2.msra.mxu0 0.0
    %216 = vmatprep.subr.mxu0 0.0
    %217 = vmatpush2.msra.mxu0 0.0
    %218 = vmatprep.subr.mxu0 0.0
    %219 = vmatpush2.msra.mxu0 0.0
    %220 = vmatprep.subr.mxu0 0.0
    %221 = vmatpush2.msra.mxu0 0.0
    %222 = vmatprep.subr.mxu0 0.0
    %223 = vmatpush2.msra.mxu0 0.0
    %224 = vmatprep.subr.mxu0 0.0
    %225 = vmatpush2.msra.mxu0 0.0
    %226 = vmatprep.subr.mxu0 0.0
    %227 = vmatpush2.msra.mxu0 0.0
    %228 = vmatprep.subr.mxu0 0.0
    %229 = vmatpush2.msra.mxu0 0.0
    %230 = vmatprep.subr.mxu0 0.0
    %231 = vmatpush2.msra.mxu0 0.0
    %232 = vmatprep.subr.mxu0 0.0
    %233 = vmatpush2.msra.mxu0 0.0
    %234 = vmatprep.subr.mxu0 0.0
    %235 = vmatpush2.msra.mxu0 0.0
    %236 = vmatprep.subr.mxu0 0.0
    %237 = vmatpush2.msra.mxu0 0.0
    %238 = vmatprep.mubr.f32.mxu0 0.0
    %239 = vmatmul.mubr.f32.gmra.mxu0 %v172
    %v240 = vpop.f32.mrf.mxu0
    %v241 = vadd.f32 %v168, %v240
    %v242 = vpop.f32.mrf.mxu0
    %243 = vdwg.mxu0
    %v244 = vmul.f32 %v151, %v241
    %v245 = vld [vmem:[%s6] sm:$0xff]
    %v246 = vld [vmem:[%s6 + $0x8] sm:$0xff]
    %v247 = vld [vmem:[%s6 + $0x10] sm:$0xff]
    %v248 = vld [vmem:[%s6 + $0x18] sm:$0xff]
    %v249 = vld [vmem:[%s6 + $0x20] sm:$0xff]
    %v250 = vld [vmem:[%s6 + $0x28] sm:$0xff]
    %v251 = vld [vmem:[%s6 + $0x30] sm:$0xff]
    %v252 = vld [vmem:[%s6 + $0x38] sm:$0xff]
    %v254 = vsel %vm170, %v244, 0
    %256 = vmatprep.subr.mxu0 0.0
    %257 = vmatpush1.msra.mxu0 0.0
    %258 = vmatprep.subr.mxu0 0.0
    %259 = vmatpush1.msra.mxu0 0.0
    %260 = vmatprep.subr.mxu0 0.0
    %261 = vmatpush1.msra.mxu0 0.0
    %262 = vmatprep.subr.mxu0 0.0
    %263 = vmatpush1.msra.mxu0 0.0
    %264 = vmatprep.subr.mxu0 0.0
    %265 = vmatpush1.msra.mxu0 0.0
    %266 = vmatprep.subr.mxu0 0.0
    %267 = vmatpush1.msra.mxu0 0.0
    %268 = vmatprep.subr.mxu0 0.0
    %269 = vmatpush1.msra.mxu0 0.0
    %270 = vmatprep.subr.mxu0 0.0
    %271 = vmatpush1.msra.mxu0 0.0
    %272 = vmatprep.subr.mxu0 0.0
    %273 = vmatpush1.msra.mxu0 %v252
    %274 = vmatprep.subr.mxu0 0.0
    %275 = vmatpush1.msra.mxu0 %v251
    %276 = vmatprep.subr.mxu0 0.0
    %277 = vmatpush1.msra.mxu0 %v250
    %278 = vmatprep.subr.mxu0 0.0
    %279 = vmatpush1.msra.mxu0 %v249
    %280 = vmatprep.subr.mxu0 0.0
    %281 = vmatpush1.msra.mxu0 %v248
    %282 = vmatprep.subr.mxu0 0.0
    %283 = vmatpush1.msra.mxu0 %v247
    %284 = vmatprep.subr.mxu0 0.0
    %285 = vmatpush1.msra.mxu0 %v246
    %286 = vmatprep.subr.mxu0 0.0
    %287 = vmatpush1.msra.mxu0 %v245
    %288 = vmatprep.subr.mxu0 0.0
    %289 = vmatpush2.msra.mxu0 0.0
    %290 = vmatprep.subr.mxu0 0.0
    %291 = vmatpush2.msra.mxu0 0.0
    %292 = vmatprep.subr.mxu0 0.0
    %293 = vmatpush2.msra.mxu0 0.0
    %294 = vmatprep.subr.mxu0 0.0
    %295 = vmatpush2.msra.mxu0 0.0
    %296 = vmatprep.subr.mxu0 0.0
    %297 = vmatpush2.msra.mxu0 0.0
    %298 = vmatprep.subr.mxu0 0.0
    %299 = vmatpush2.msra.mxu0 0.0
    %300 = vmatprep.subr.mxu0 0.0
    %301 = vmatpush2.msra.mxu0 0.0
    %302 = vmatprep.subr.mxu0 0.0
    %303 = vmatpush2.msra.mxu0 0.0
    %304 = vmatprep.subr.mxu0 0.0
    %305 = vmatpush2.msra.mxu0 0.0
    %306 = vmatprep.subr.mxu0 0.0
    %307 = vmatpush2.msra.mxu0 0.0
    %308 = vmatprep.subr.mxu0 0.0
    %309 = vmatpush2.msra.mxu0 0.0
    %310 = vmatprep.subr.mxu0 0.0
    %311 = vmatpush2.msra.mxu0 0.0
    %312 = vmatprep.subr.mxu0 0.0
    %313 = vmatpush2.msra.mxu0 0.0
    %314 = vmatprep.subr.mxu0 0.0
    %315 = vmatpush2.msra.mxu0 0.0
    %316 = vmatprep.subr.mxu0 0.0
    %317 = vmatpush2.msra.mxu0 0.0
    %318 = vmatprep.subr.mxu0 0.0
    %319 = vmatpush2.msra.mxu0 0.0
    %320 = vmatprep.mubr.f32.mxu0 0.0
    %321 = vmatmul.mubr.f32.gmra.mxu0 %v254
    %v322 = vpop.f32.mrf.mxu0
    %v323 = vadd.f32 0.0, %v322
    %v324 = vpop.f32.mrf.mxu0
    %325 = vdwg.mxu0
    %v326 = vtanh.pop %v323
    %327 = vst.msk [vmem:[#allocation8] sm:$0xff] %vm80, %v326
    %v328 = vld [vmem:[#allocation7] sm:$0xff]
    %v329 = vld [vmem:[%s8] sm:$0x1]
    %v331 = vlaneseq
    %v332 = vshrl.u32 %v331, 7
    %v333 = vsub.s32 0, %v332
    %v334 = vrot.slane %v329, %v333
    %v337 = vsel %vm80, %v326, 0
    %339 = vmatprep.subr.mxu0 0.0
    %340 = vmatpush1.msra.mxu0 0.0
    %341 = vmatprep.subr.mxu0 0.0
    %342 = vmatpush1.msra.mxu0 0.0
    %343 = vmatprep.subr.mxu0 0.0
    %344 = vmatpush1.msra.mxu0 0.0
    %345 = vmatprep.subr.mxu0 0.0
    %346 = vmatpush1.msra.mxu0 0.0
    %347 = vmatprep.subr.mxu0 0.0
    %348 = vmatpush1.msra.mxu0 0.0
    %349 = vmatprep.subr.mxu0 0.0
    %350 = vmatpush1.msra.mxu0 0.0
    %351 = vmatprep.subr.mxu0 0.0
    %352 = vmatpush1.msra.mxu0 0.0
    %353 = vmatprep.subr.mxu0 0.0
    %354 = vmatpush1.msra.mxu0 0.0
    %355 = vmatprep.subr.mxu0 0.0
    %356 = vmatpush1.msra.mxu0 0.0
    %357 = vmatprep.subr.mxu0 0.0
    %358 = vmatpush1.msra.mxu0 0.0
    %359 = vmatprep.subr.mxu0 0.0
    %360 = vmatpush1.msra.mxu0 0.0
    %361 = vmatprep.subr.mxu0 0.0
    %362 = vmatpush1.msra.mxu0 0.0
    %363 = vmatprep.subr.mxu0 0.0
    %364 = vmatpush1.msra.mxu0 0.0
    %365 = vmatprep.subr.mxu0 0.0
    %366 = vmatpush1.msra.mxu0 0.0
    %367 = vmatprep.subr.mxu0 0.0
    %368 = vmatpush1.msra.mxu0 0.0
    %369 = vmatprep.subr.mxu0 0.0
    %370 = vmatpush1.msra.mxu0 %v328
    %371 = vmatprep.subr.mxu0 0.0
    %372 = vmatpush2.msra.mxu0 0.0
    %373 = vmatprep.subr.mxu0 0.0
    %374 = vmatpush2.msra.mxu0 0.0
    %375 = vmatprep.subr.mxu0 0.0
    %376 = vmatpush2.msra.mxu0 0.0
    %377 = vmatprep.subr.mxu0 0.0
    %378 = vmatpush2.msra.mxu0 0.0
    %379 = vmatprep.subr.mxu0 0.0
    %380 = vmatpush2.msra.mxu0 0.0
    %381 = vmatprep.subr.mxu0 0.0
    %382 = vmatpush2.msra.mxu0 0.0
    %383 = vmatprep.subr.mxu0 0.0
    %384 = vmatpush2.msra.mxu0 0.0
    %385 = vmatprep.subr.mxu0 0.0
    %386 = vmatpush2.msra.mxu0 0.0
    %387 = vmatprep.subr.mxu0 0.0
    %388 = vmatpush2.msra.mxu0 0.0
    %389 = vmatprep.subr.mxu0 0.0
    %390 = vmatpush2.msra.mxu0 0.0
    %391 = vmatprep.subr.mxu0 0.0
    %392 = vmatpush2.msra.mxu0 0.0
    %393 = vmatprep.subr.mxu0 0.0
    %394 = vmatpush2.msra.mxu0 0.0
    %395 = vmatprep.subr.mxu0 0.0
    %396 = vmatpush2.msra.mxu0 0.0
    %397 = vmatprep.subr.mxu0 0.0
    %398 = vmatpush2.msra.mxu0 0.0
    %399 = vmatprep.subr.mxu0 0.0
    %400 = vmatpush2.msra.mxu0 0.0
    %401 = vmatprep.subr.mxu0 0.0
    %402 = vmatpush2.msra.mxu0 0.0
    %403 = vmatprep.mubr.f32.mxu0 0.0
    %404 = vmatmul.mubr.f32.gmra.mxu0 %v337
    %v405 = vpop.f32.mrf.mxu0
    %v406 = vadd.f32 %v334, %v405
    %v407 = vpop.f32.mrf.mxu0
    %408 = vdwg.mxu0
    %vm409 = vcmask 130048
    %410 = vst.msk [vmem:[#allocation9] sm:$0xff] %vm409, %v406
    // Predicated region
    $region50: #{tpu_custom_call.1} parent=1 // pred_check
      _
    $region51: #{tpu_custom_call.1} parent=1 // pred_check_branch
      %412 = sbr.rel (0) target = $region53
    $region52: #{tpu_custom_call.1} parent=1 // pred_region
      %s414 = ssub.s32 128, 128
      %415 = vsyncadd [#allocation4], %s414
      %s417 = sshll.u32 [#allocation8], 4
      %s418 = int_to_ptr.vmem [resolvable:$true] %s417
      %420 = dma.vmem_to_hbm [thread:$0]  %s418, 128, %s9, [#allocation4]
    $region53: #{tpu_custom_call.1} parent=1 // pred_fallthru
      _
    // Predicated region
    $region54: #{tpu_custom_call.1} parent=1 // pred_check
      _
    $region55: #{tpu_custom_call.1} parent=1 // pred_check_branch
      %422 = sbr.rel (0) target = $region57
    $region56: #{tpu_custom_call.1} parent=1 // pred_region
      %s424 = ssub.s32 128, 128
      %425 = vsyncadd [#allocation10], %s424
      %s427 = sshll.u32 [#allocation9], 4
      %s428 = int_to_ptr.vmem [resolvable:$true] %s427
      %430 = dma.vmem_to_hbm [thread:$0]  %s428, 128, %s10, [#allocation10]
    $region57: #{tpu_custom_call.1} parent=1 // pred_fallthru
      _
    // Predicated region
    $region58: #{tpu_custom_call.1} parent=1 // pred_check
      _
    $region59: #{tpu_custom_call.1} parent=1 // pred_check_branch
      %432 = sbr.rel (0) target = $region61
    $region60: #{tpu_custom_call.1} parent=1 // pred_region
      %433 = dma.done [#allocation4], 128
    $region61: #{tpu_custom_call.1} parent=1 // pred_fallthru
      _
    // Predicated region
    $region62: #{tpu_custom_call.1} parent=1 // pred_check
      _
    $region63: #{tpu_custom_call.1} parent=1 // pred_check_branch
      %435 = sbr.rel (0) target = $region65
    $region64: #{tpu_custom_call.1} parent=1 // pred_region
      %436 = dma.done [#allocation10], 128
    $region65: #{tpu_custom_call.1} parent=1 // pred_fallthru
      _
    %437 = vsyncpa [#allocation3], 1
    %438 = vsyncpa [#allocation6], 1
    %439 = vsyncpa [#allocation4], 1
    %440 = vsyncpa [#allocation10], 1

</llo_original>
